<compile_context>
chip_gen: v6e
topology: v6e:2x2x1
jax: 0.10.0
libtpu: 0.0.40
codegen_flags: <defaults>
</compile_context>

<pallas_src>
import jax
import jax.numpy as jnp
from jax.experimental import pallas as pl
from jax.experimental.pallas import tpu as pltpu


def _hswish_kernel(x_ref, o_ref):
    x = x_ref[...]
    # relu6(x + 3) = clamp(x + 3, 0, 6); all VPU elementwise ops.
    r6 = jnp.clip(x + 3.0, 0.0, 6.0)
    o_ref[...] = (x * r6 * (1.0 / 6.0)).astype(o_ref.dtype)


def hswish(x: jax.Array, *, target_block_bytes: int = 2 << 20) -> jax.Array:
    """Elementwise h-swish. Accepts any shape; internally tiles a flattened
    lane-dense 2-D view with large blocks (HBM-roofline oriented)."""
    orig_shape = x.shape
    dtype = x.dtype
    total = x.size
    itemsize = jnp.dtype(dtype).itemsize
    # Sublane packing factor: 8 for 32-bit, 16 for 16-bit, 32 for 8-bit dtypes.
    sub = {4: 8, 2: 16, 1: 32}.get(itemsize, 8)

    # Widest lane-dense width that divides the flat size (no padding needed
    # in the common case).
    wide = None
    for cand in (1024, 512, 256, 128):
        if total % cand == 0:
            wide = cand
            break

    x_flat = jnp.ravel(x)
    padded_total = total
    if wide is None:
        # Ragged-size fallback: pad up to the next multiple of 128.
        # TODO(synk): handle the sub-128 tail inside the kernel to avoid the
        # extra pad/slice HBM passes for non-multiple-of-128 sizes.
        wide = 128
        padded_total = pl.cdiv(total, wide) * wide
        x_flat = jnp.pad(x_flat, (0, padded_total - total))

    rows = padded_total // wide
    x2d = x_flat.reshape(rows, wide)

    # Row tile: ~target_block_bytes per block, rounded down to the sublane
    # packing multiple. Ragged last block (if any) is masked by Pallas.
    tr = max(sub, (target_block_bytes // (wide * itemsize)) // sub * sub)
    if tr >= rows:
        if rows > sub:
            # Split into >=2 grid steps so both v7x TensorCores get work.
            tr = ((pl.cdiv(rows, 2) + sub - 1) // sub) * sub
        else:
            # Tiny input: single block equal to the full array extent.
            tr = rows
    grid = (pl.cdiv(rows, tr),)

    block_bytes = tr * wide * itemsize
    # (in + out) x 2 pipeline buffers x block, plus headroom; 32 MiB floor is
    # safe within the scoped VMEM of v5e/v6e/v7x.
    vmem_limit = max(4 * block_bytes + (4 << 20), 32 << 20)

    out2d = pl.pallas_call(
        _hswish_kernel,
        out_shape=jax.ShapeDtypeStruct((rows, wide), dtype),
        grid=grid,
        in_specs=[pl.BlockSpec((tr, wide), lambda i: (i, 0))],
        out_specs=pl.BlockSpec((tr, wide), lambda i: (i, 0)),
        compiler_params=pltpu.CompilerParams(
            dimension_semantics=("parallel",),
            vmem_limit_bytes=int(vmem_limit),
        ),
    )(x2d)

    if padded_total != total:
        return out2d.reshape(-1)[:total].reshape(orig_shape)
    return out2d.reshape(orig_shape)


def hswish_ref(x):
    return x * jnp.clip(x + 3.0, 0.0, 6.0) / 6.0


if __name__ == "__main__":
    key = jax.random.PRNGKey(0)
    # NCHW, small shapes consistent with a conv-net activation.
    x = jax.random.normal(key, (2, 4, 16, 16), dtype=jnp.float32) * 4.0

    out = hswish(x)
    out = jax.block_until_ready(out)

    ref = hswish_ref(x)
    assert out.shape == x.shape and out.dtype == x.dtype
    assert jnp.allclose(out, ref, atol=1e-5, rtol=1e-6)
    print("KERNEL_OK")
</pallas_src>

<mosaic_0001>
module attributes {stable_mosaic.version = 11 : i64} {
  func.func @_hswish_kernel(%arg0: i32, %arg1: memref<2x1024xf32, #tpu.memory_space<vmem>>, %arg2: memref<2x1024xf32, #tpu.memory_space<vmem>>) attributes {dimension_semantics = [#tpu.dimension_semantics<parallel>], iteration_bounds = array<i64: 1>, scalar_prefetch = 0 : i64, scratch_operands = 0 : i64, tpu.core_type = #tpu.core_type<tc>, window_params = [{transform_indices = @transform_0, window_bounds = array<i64: 2, 1024>}, {transform_indices = @transform_1, window_bounds = array<i64: 2, 1024>}]} {
    %c0 = arith.constant 0 : index
    %c0_0 = arith.constant 0 : index
    %0 = vector.load %arg1[%c0, %c0_0] : memref<2x1024xf32, #tpu.memory_space<vmem>>, vector<2x1024xf32>
    %cst = arith.constant 3.000000e+00 : f32
    %1 = vector.broadcast %cst : f32 to vector<2x1024xf32>
    %2 = arith.addf %0, %1 : vector<2x1024xf32>
    %cst_1 = arith.constant 0.000000e+00 : f32
    %cst_2 = arith.constant 6.000000e+00 : f32
    %3 = vector.broadcast %cst_1 : f32 to vector<2x1024xf32>
    %4 = arith.maximumf %3, %2 : vector<2x1024xf32>
    %5 = vector.broadcast %cst_2 : f32 to vector<2x1024xf32>
    %6 = arith.minimumf %5, %4 : vector<2x1024xf32>
    %7 = arith.mulf %0, %6 : vector<2x1024xf32>
    %cst_3 = arith.constant 0.166666672 : f32
    %8 = vector.broadcast %cst_3 : f32 to vector<2x1024xf32>
    %9 = arith.mulf %7, %8 : vector<2x1024xf32>
    %c0_4 = arith.constant 0 : index
    %c0_5 = arith.constant 0 : index
    %10 = vector.load %arg2[%c0_4, %c0_5] : memref<2x1024xf32, #tpu.memory_space<vmem>>, vector<2x1024xf32>
    tpu.vector_store %arg2[%c0_4, %c0_5], %9 {strides = array<i32>} : memref<2x1024xf32, #tpu.memory_space<vmem>>, vector<2x1024xf32>,
    return
  }
  func.func @transform_0(%arg0: i32) -> (i32, i32) {
    %c0_i32 = arith.constant 0 : i32
    %c0_i32_0 = arith.constant 0 : i32
    return %arg0, %c0_i32 : i32, i32
  }
  func.func @transform_1(%arg0: i32) -> (i32, i32) {
    %c0_i32 = arith.constant 0 : i32
    %c0_i32_0 = arith.constant 0 : i32
    return %arg0, %c0_i32 : i32, i32
  }
}

</mosaic_0001>

<llo_original>
// kernel: tpu_custom_call.1
$region0: #{tpu_custom_call.1}
  #allocation0 [shape = 'u32[]', space=smem, size = 0x4, offset = 0x4, fixed_abs, tag = 'smem constant byte address 0x4 - core index']
  #allocation1 [shape = 'u32[144,128]{1,0:T(1,128)}', space=vmem, size = 0x12000, scoped, tag = 'internal scratch']
  %s0 = inlined_call_operand.hbm [shape: f32[2,1024], index: 0, kind: input, shape index: {}]
  %s1 = inlined_call_operand.hbm [shape: f32[2,1024], index: 1, kind: output, shape index: {}]
  %s2 = sld [smem:[#allocation0]]
  $region18: #{tpu_custom_call.1} parent=0
    _
  %s4 = ssub.s32 1, %s2
  %s5 = scalar_select 0, %s4, %s2
  $region1: #{tpu_custom_call.1} parent=0
    #allocation2 [shape = 'u8[8192]{0}', space=vmem, size = 0x2000, scoped, tag = 'input window, operand 0, single buffered']
    #allocation3 [shape = 's32[1]{0}', space=sflag, size = 0x4, scoped, tag = 'scoped memory for tpu_custom_call.1']
    #allocation4 [shape = 's32[1]{0}', space=sflag, size = 0x4, scoped, tag = 'scoped memory for tpu_custom_call.1']
    #allocation5 [shape = 'u8[8192]{0}', space=vmem, size = 0x2000, scoped, tag = 'output window, operand 0, single buffered']
    %6 = vsyncpa [#allocation3], 0
    %7 = vsyncpa [#allocation4], 0
    // Predicated region
    $region2: #{tpu_custom_call.1} parent=1 // pred_check
      _
    $region3: #{tpu_custom_call.1} parent=1 // pred_check_branch
      %9 = sbr.rel (0) target = $region5
    $region4: #{tpu_custom_call.1} parent=1 // pred_region
      %s11 = ssub.s32 256, 256
      %12 = vsyncadd [#allocation3], %s11
      %s14 = sshll.u32 [#allocation2], 4
      %s15 = int_to_ptr.vmem [resolvable:$true] %s14
      %17 = dma.hbm_to_vmem [thread:$0]  %s0, 256, %s15, [#allocation3]
    $region5: #{tpu_custom_call.1} parent=1 // pred_fallthru
      _
    // Predicated region
    $region6: #{tpu_custom_call.1} parent=1 // pred_check
      _
    $region7: #{tpu_custom_call.1} parent=1 // pred_check_branch
      %19 = sbr.rel (0) target = $region9
    $region8: #{tpu_custom_call.1} parent=1 // pred_region
      %20 = dma.done [#allocation3], 256
    $region9: #{tpu_custom_call.1} parent=1 // pred_fallthru
      _
    %v21 = vld [vmem:[#allocation2] sm:$0xff]
    %v22 = vld [vmem:[#allocation2 + $0x8] sm:$0xff]
    %v23 = vadd.f32 %v21, 3.0
    %v24 = vadd.f32 %v22, 3.0
    %v25 = vmax.f32 %v23, 0.0
    %v26 = vmax.f32 %v24, 0.0
    %v27 = vmin.f32 %v25, 6.0
    %v28 = vmin.f32 %v26, 6.0
    %v29 = vmul.f32 %v21, %v27
    %v30 = vmul.f32 %v22, %v28
    %v31 = vmul.f32 %v29, 0.16666667
    %v32 = vmul.f32 %v30, 0.16666667
    %33 = vst [vmem:[#allocation5] sm:$0xff] %v31
    %34 = vst [vmem:[#allocation5 + $0x8] sm:$0xff] %v32
    // Predicated region
    $region10: #{tpu_custom_call.1} parent=1 // pred_check
      _
    $region11: #{tpu_custom_call.1} parent=1 // pred_check_branch
      %36 = sbr.rel (0) target = $region13
    $region12: #{tpu_custom_call.1} parent=1 // pred_region
      %s38 = ssub.s32 256, 256
      %39 = vsyncadd [#allocation4], %s38
      %s41 = sshll.u32 [#allocation5], 4
      %s42 = int_to_ptr.vmem [resolvable:$true] %s41
      %44 = dma.vmem_to_hbm [thread:$0]  %s42, 256, %s1, [#allocation4]
    $region13: #{tpu_custom_call.1} parent=1 // pred_fallthru
      _
    // Predicated region
    $region14: #{tpu_custom_call.1} parent=1 // pred_check
      _
    $region15: #{tpu_custom_call.1} parent=1 // pred_check_branch
      %46 = sbr.rel (0) target = $region17
    $region16: #{tpu_custom_call.1} parent=1 // pred_region
      %47 = dma.done [#allocation4], 256
    $region17: #{tpu_custom_call.1} parent=1 // pred_fallthru
      _
    %48 = vsyncpa [#allocation3], 1
    %49 = vsyncpa [#allocation4], 1

</llo_original>
